<compile_context>
chip_gen: v5e
topology: v5e:2x2
jax: 0.10.0
libtpu: 0.0.40
codegen_flags: <defaults>
</compile_context>

<pallas_src>
import jax
import jax.numpy as jnp
from jax.experimental import pallas as pl
from jax.experimental.pallas import tpu as pltpu


def _round_up(v, m):
    return ((v + m - 1) // m) * m


def _cdiv(a, b):
    return -(-a // b)


def _vmem_capacity_bytes():
    """Physical per-TensorCore VMEM; conservative (v7x-sized) fallback."""
    try:
        info = pltpu.get_tpu_info()
        cap = getattr(info, "vmem_capacity_bytes", None)
        if cap:
            return int(cap)
    except Exception:
        pass
    return 64 << 20


def _choose_tile_rows(n_rows, dp, out_itemsize, vmem_cap, min_steps=8):
    """Row tile (multiple of 8) sized from this chip's VMEM budget.

    Keeps 2x(input block) + 2x(output block) double-buffering well inside the
    scoped-VMEM limit on every generation (v7x has only 64 MiB per TC), while
    guaranteeing a handful of grid steps so megacore sharding and the
    double-buffered pipeline actually engage.
    """
    vmem_limit = min((vmem_cap * 3) // 4, 96 << 20)
    per_row_bytes = dp * (4 + out_itemsize)                  # f32 in + out
    max_rows = max(8, (vmem_limit // 4) // per_row_bytes)    # 2x(in+out) <= limit/2
    rows_for_steps = max(8, _cdiv(n_rows, min_steps))
    tile = min(max_rows, rows_for_steps)
    tile = max(8, (tile // 8) * 8)
    if tile >= n_rows:
        tile = n_rows        # single full-extent block (allowed: equals full dim)
    return int(tile), int(vmem_limit)


def _make_kernel(tile, n_rows, num_blocks):
    """Kernel closure; tile / n_rows / num_blocks are static Python ints."""
    rem = n_rows - (num_blocks - 1) * tile   # valid rows in the last block

    def kernel(x_ref, stats_ref, out_ref, partial_ref):
        x = x_ref[...]                       # (tile, Dp) f32
        mean = stats_ref[0:1, :]             # (1, Dp)
        inv = stats_ref[1:2, :]              # (1, Dp) = 1/max(sqrt(var), eps)
        out_ref[...] = ((x - mean) * inv).astype(out_ref.dtype)

        if rem == tile:
            # Every block is full: straight column sum.
            partial_ref[0] = jnp.sum(x, axis=0, keepdims=True)
        else:
            i = pl.program_id(0)
            last = num_blocks - 1

            @pl.when(i != last)
            def _():
                partial_ref[0] = jnp.sum(x, axis=0, keepdims=True)

            @pl.when(i == last)
            def _():
                # Rows >= rem hold stale VMEM data (the input block is OOB
                # there); mask them out of the running-stat column sum.
                # Pallas itself masks the OOB part of the output write-back.
                row_ids = jax.lax.broadcasted_iota(jnp.int32, x.shape, 0)
                xm = jnp.where(row_ids < rem, x, 0.0)
                partial_ref[0] = jnp.sum(xm, axis=0, keepdims=True)

    return kernel


def _rsmnorm_pallas(x2d, running_mean, running_variance, *, eps,
                    out_dtype=None, tile_rows=None):
    """x2d: (N, D) float32. Returns (normed (N, D) out_dtype, col_sum (D,) f32)."""
    n, d = x2d.shape
    out_dtype = out_dtype or x2d.dtype

    # ---- O(D) precompute: reciprocal of clamped stddev --------------------
    mean_f = running_mean.astype(jnp.float32)
    inv_f = 1.0 / jnp.maximum(jnp.sqrt(running_variance.astype(jnp.float32)),
                              jnp.float32(eps))

    # ---- lane layout: streamed last dim must be a multiple of 128 ---------
    if d % 128 == 0:
        fold, dp, row_pad = 1, d, 0
        x_in, mean_p, inv_p, n_rows = x2d, mean_f, inv_f, n
    elif 128 % d == 0:
        # Fold `fold` consecutive rows into one 128-lane row: metadata-only
        # row-major reshape, no zero-padding of the feature dim.
        fold = 128 // d
        dp = 128
        row_pad = (-n) % fold
        x_src = x2d if row_pad == 0 else jnp.pad(x2d, ((0, row_pad), (0, 0)))
        n_rows = (n + row_pad) // fold
        x_in = x_src.reshape(n_rows, dp)
        mean_p = jnp.tile(mean_f, fold)
        inv_p = jnp.tile(inv_f, fold)
    else:
        # Fallback for awkward D (neither multiple nor divisor of 128).
        fold, row_pad = 1, 0
        dp = _round_up(d, 128)
        x_in = jnp.pad(x2d, ((0, 0), (0, dp - d)))
        mean_p = jnp.pad(mean_f, (0, dp - d))
        inv_p = jnp.pad(inv_f, (0, dp - d))      # padded lanes -> output 0
        n_rows = n

    # Fused side input: one constant-index BlockSpec instead of two.
    stats = jnp.stack([mean_p, inv_p], axis=0)   # (2, dp) f32

    # ---- generation-aware tiling -------------------------------------------
    vmem_cap = _vmem_capacity_bytes()
    out_itemsize = jnp.dtype(out_dtype).itemsize
    if tile_rows is not None:
        tile = int(min(tile_rows, n_rows))
        if tile < n_rows:
            tile = max(8, (tile // 8) * 8)
        vmem_limit = min((vmem_cap * 3) // 4, 96 << 20)
    else:
        tile, vmem_limit = _choose_tile_rows(n_rows, dp, out_itemsize, vmem_cap)

    num_blocks = _cdiv(n_rows, tile)             # no row padding of x needed
    kernel = _make_kernel(tile, n_rows, num_blocks)

    normed_p, partials = pl.pallas_call(
        kernel,
        out_shape=(
            jax.ShapeDtypeStruct((n_rows, dp), out_dtype),
            jax.ShapeDtypeStruct((num_blocks, 1, dp), jnp.float32),
        ),
        grid_spec=pltpu.PrefetchScalarGridSpec(
            num_scalar_prefetch=0,
            grid=(num_blocks,),
            in_specs=[
                pl.BlockSpec((tile, dp), lambda i: (i, 0)),
                pl.BlockSpec((2, dp), lambda i: (0, 0)),
            ],
            out_specs=[
                pl.BlockSpec((tile, dp), lambda i: (i, 0)),
                # Per-block partial sums -> no cross-iteration accumulator, so
                # the grid axis is safely parallel (megacore / v7x dual-TC).
                pl.BlockSpec((1, 1, dp), lambda i: (i, 0, 0)),
            ],
        ),
        compiler_params=pltpu.CompilerParams(
            dimension_semantics=("parallel",),
            vmem_limit_bytes=int(vmem_limit),
        ),
    )(x_in, stats)

    # ---- undo the lane fold / pad ------------------------------------------
    col_sum_p = jnp.sum(partials, axis=0)[0]     # (dp,)
    if fold > 1:
        normed2d = normed_p.reshape(n_rows * fold, d)
        if row_pad:
            normed2d = normed2d[:n]
        col_sum = col_sum_p.reshape(fold, d).sum(axis=0)
    elif dp != d:
        normed2d = normed_p[:, :d]
        col_sum = col_sum_p[:d]
    else:
        normed2d, col_sum = normed_p, col_sum_p

    return normed2d, col_sum


def rsmnorm_forward(x, state, *, training=True, eps=1e-5, out_dtype=None,
                    tile_rows=None):
    """Functional equivalent of RSMNorm.forward.

    x: (..., dim); state: dict with 'step' (int32 scalar), 'running_mean'
    (dim,), 'running_variance' (dim,).  Returns (normed, new_state).
    """
    dim = state["running_mean"].shape[0]
    assert x.shape[-1] == dim

    orig_shape = x.shape
    x2d = x.reshape(-1, dim)
    n = x2d.shape[0]

    normed2d, col_sum = _rsmnorm_pallas(
        x2d, state["running_mean"], state["running_variance"],
        eps=eps, out_dtype=out_dtype, tile_rows=tile_rows,
    )
    normed = normed2d.reshape(orig_shape)

    if not training:
        return normed, state

    # TODO(synk): torch mutates registered buffers in place; here the update
    # is returned as a new functional state dict.
    time = state["step"].astype(jnp.float32)
    mean = state["running_mean"]
    variance = state["running_variance"]

    new_obs_mean = col_sum / n                   # reduce('... d -> d', 'mean')
    delta = new_obs_mean - mean
    new_mean = mean + delta / time
    new_variance = (time - 1.0) / time * (variance + delta ** 2 / time)

    new_state = {
        "step": state["step"] + 1,
        "running_mean": new_mean,
        "running_variance": new_variance,
    }
    return normed, new_state


def _reference(x, state, eps=1e-5):
    denom = jnp.maximum(jnp.sqrt(state["running_variance"]), eps)
    normed = (x - state["running_mean"]) / denom
    dim = state["running_mean"].shape[0]
    obs_mean = x.reshape(-1, dim).mean(axis=0)
    t = state["step"].astype(jnp.float32)
    delta = obs_mean - state["running_mean"]
    new_mean = state["running_mean"] + delta / t
    new_var = (t - 1.0) / t * (state["running_variance"] + delta ** 2 / t)
    return normed, new_mean, new_var


if __name__ == "__main__":
    # --- case 1: the module's small-D demo (D=32 -> folded 4 rows/lane-row) ---
    dim = 32
    batch, seq = 2, 8
    key = jax.random.PRNGKey(0)
    x = jax.random.normal(key, (batch, seq, dim), dtype=jnp.float32)

    state = {
        "step": jnp.array(1, dtype=jnp.int32),
        "running_mean": jnp.zeros((dim,), dtype=jnp.float32),
        "running_variance": jnp.ones((dim,), dtype=jnp.float32),
    }

    normed, new_state = rsmnorm_forward(x, state, training=True)
    normed = jax.block_until_ready(normed)
    jax.block_until_ready(new_state["running_mean"])

    ref_normed, ref_mean, ref_var = _reference(x, state)
    assert jnp.allclose(normed, ref_normed, atol=1e-5, rtol=1e-5)
    assert jnp.allclose(new_state["running_mean"], ref_mean, atol=1e-5, rtol=1e-5)
    assert jnp.allclose(new_state["running_variance"], ref_var, atol=1e-5, rtol=1e-5)
    assert int(new_state["step"]) == 2

    # --- case 2: D=128 (lane-dense), ragged last block (20 rows, tile=8) ------
    dim2, n2 = 128, 20
    k1, k2, k3 = jax.random.split(jax.random.PRNGKey(1), 3)
    x2 = jax.random.normal(k1, (n2, dim2), dtype=jnp.float32)
    state2 = {
        "step": jnp.array(3, dtype=jnp.int32),
        "running_mean": jax.random.normal(k2, (dim2,), dtype=jnp.float32),
        "running_variance": jax.random.uniform(k3, (dim2,), dtype=jnp.float32,
                                               minval=0.5, maxval=2.0),
    }
    normed2, new_state2 = rsmnorm_forward(x2, state2, training=True, tile_rows=8)
    normed2 = jax.block_until_ready(normed2)
    ref_normed2, ref_mean2, ref_var2 = _reference(x2, state2)
    assert jnp.allclose(normed2, ref_normed2, atol=1e-5, rtol=1e-5)
    assert jnp.allclose(new_state2["running_mean"], ref_mean2, atol=1e-5, rtol=1e-5)
    assert jnp.allclose(new_state2["running_variance"], ref_var2, atol=1e-5, rtol=1e-5)

    print("KERNEL_OK")
</pallas_src>

<mosaic_0001>
module attributes {stable_mosaic.version = 11 : i64} {
  func.func @kernel(%arg0: i32, %arg1: memref<4x128xf32, #tpu.memory_space<vmem>>, %arg2: memref<2x128xf32, #tpu.memory_space<vmem>>, %arg3: memref<4x128xf32, #tpu.memory_space<vmem>>, %arg4: memref<1x1x128xf32, #tpu.memory_space<vmem>>) attributes {dimension_semantics = [#tpu.dimension_semantics<parallel>], iteration_bounds = array<i64: 1>, scalar_prefetch = 0 : i64, scratch_operands = 0 : i64, tpu.core_type = #tpu.core_type<tc>, window_params = [{transform_indices = @transform_0, window_bounds = array<i64: 4, 128>}, {pipeline_mode = #tpu.pipeline_mode<synchronous>, transform_indices = @transform_1, window_bounds = array<i64: 2, 128>}, {transform_indices = @transform_2, window_bounds = array<i64: 4, 128>}, {transform_indices = @transform_3, window_bounds = array<i64: 1, 1, 128>}]} {
    %c0 = arith.constant 0 : index
    %c0_0 = arith.constant 0 : index
    %0 = vector.load %arg1[%c0, %c0_0] : memref<4x128xf32, #tpu.memory_space<vmem>>, vector<4x128xf32>
    %c0_1 = arith.constant 0 : index
    %c0_2 = arith.constant 0 : index
    %1 = vector.load %arg2[%c0_1, %c0_2] : memref<2x128xf32, #tpu.memory_space<vmem>>, vector<1x128xf32>
    %c1 = arith.constant 1 : index
    %c0_3 = arith.constant 0 : index
    %2 = vector.load %arg2[%c1, %c0_3] : memref<2x128xf32, #tpu.memory_space<vmem>>, vector<1x128xf32>
    %3 = vector.broadcast %1 : vector<1x128xf32> to vector<4x128xf32>
    %4 = arith.subf %0, %3 : vector<4x128xf32>
    %5 = vector.broadcast %2 : vector<1x128xf32> to vector<4x128xf32>
    %6 = arith.mulf %4, %5 : vector<4x128xf32>
    %c0_4 = arith.constant 0 : index
    %c0_5 = arith.constant 0 : index
    %7 = vector.load %arg3[%c0_4, %c0_5] : memref<4x128xf32, #tpu.memory_space<vmem>>, vector<4x128xf32>
    tpu.vector_store %arg3[%c0_4, %c0_5], %6 {strides = array<i32>} : memref<4x128xf32, #tpu.memory_space<vmem>>, vector<4x128xf32>,
    %cst = arith.constant dense<0.000000e+00> : vector<128xf32>
    %8 = vector.multi_reduction <add>, %0, %cst [0] : vector<4x128xf32> to vector<128xf32>
    %9 = vector.shape_cast %8 : vector<128xf32> to vector<1x128xf32>
    %c0_6 = arith.constant 0 : index
    %c0_7 = arith.constant 0 : index
    %c0_8 = arith.constant 0 : index
    %10 = vector.load %arg4[%c0_6, %c0_7, %c0_8] : memref<1x1x128xf32, #tpu.memory_space<vmem>>, vector<1x1x128xf32>
    %11 = vector.shape_cast %10 : vector<1x1x128xf32> to vector<1x128xf32>
    %12 = vector.shape_cast %9 : vector<1x128xf32> to vector<1x1x128xf32>
    tpu.vector_store %arg4[%c0_6, %c0_7, %c0_8], %12 {strides = array<i32>} : memref<1x1x128xf32, #tpu.memory_space<vmem>>, vector<1x1x128xf32>,
    return
  }
  func.func @transform_0(%arg0: i32) -> (i32, i32) {
    %c0_i32 = arith.constant 0 : i32
    %c0_i32_0 = arith.constant 0 : i32
    return %arg0, %c0_i32 : i32, i32
  }
  func.func @transform_1(%arg0: i32) -> (i32, i32) {
    %c0_i32 = arith.constant 0 : i32
    %c0_i32_0 = arith.constant 0 : i32
    %c0_i32_1 = arith.constant 0 : i32
    return %c0_i32, %c0_i32_0 : i32, i32
  }
  func.func @transform_2(%arg0: i32) -> (i32, i32) {
    %c0_i32 = arith.constant 0 : i32
    %c0_i32_0 = arith.constant 0 : i32
    return %arg0, %c0_i32 : i32, i32
  }
  func.func @transform_3(%arg0: i32) -> (i32, i32, i32) {
    %c0_i32 = arith.constant 0 : i32
    %c0_i32_0 = arith.constant 0 : i32
    %c0_i32_1 = arith.constant 0 : i32
    return %arg0, %c0_i32, %c0_i32_0 : i32, i32, i32
  }
}

</mosaic_0001>

<llo_original>
// kernel: tpu_custom_call.1
$region0: #{tpu_custom_call.1}
  #allocation0 [shape = 'u32[]', space=smem, size = 0x4, offset = 0x4, fixed_abs, tag = 'smem constant byte address 0x4 - core index']
  #allocation1 [shape = 'u32[72,128]{1,0:T(1,128)}', space=vmem, size = 0x9000, scoped, tag = 'internal scratch']
  %s0 = inlined_call_operand.hbm [shape: f32[4,128], index: 0, kind: input, shape index: {}]
  %s1 = inlined_call_operand.hbm [shape: f32[2,128], index: 1, kind: input, shape index: {}]
  %s2 = inlined_call_operand.hbm [shape: f32[4,128], index: 2, kind: output, shape index: {0}]
  %s3 = inlined_call_operand.hbm [shape: f32[1,1,128], index: 3, kind: output, shape index: {1}]
  %4 = xla_tuple %s2, %s3
  %s5 = sld [smem:[#allocation0]]
  $region34: #{tpu_custom_call.1} parent=0
    _
  %s7 = ssub.s32 1, %s5
  %s8 = scalar_select 0, %s7, %s5
  $region1: #{tpu_custom_call.1} parent=0
    #allocation2 [shape = 'u8[2048]{0}', space=vmem, size = 0x800, scoped, tag = 'input window, operand 0, single buffered']
    #allocation3 [shape = 's32[1]{0}', space=sflag, size = 0x4, scoped, tag = 'scoped memory for tpu_custom_call.1']
    #allocation4 [shape = 's32[1]{0}', space=sflag, size = 0x4, scoped, tag = 'scoped memory for tpu_custom_call.1']
    #allocation5 [shape = 'u8[1024]{0}', space=vmem, size = 0x400, scoped, tag = 'input window, operand 1, single buffered']
    #allocation6 [shape = 's32[1]{0}', space=sflag, size = 0x4, scoped, tag = 'scoped memory for tpu_custom_call.1']
    #allocation7 [shape = 'u8[2048]{0}', space=vmem, size = 0x800, scoped, tag = 'output window, operand 0, single buffered']
    #allocation8 [shape = 'u8[512]{0}', space=vmem, size = 0x400, scoped, tag = 'output window, operand 1, single buffered']
    #allocation9 [shape = 's32[1]{0}', space=sflag, size = 0x4, scoped, tag = 'scoped memory for tpu_custom_call.1']
    %9 = vsyncpa [#allocation3], 0
    %10 = vsyncpa [#allocation6], 0
    %11 = vsyncpa [#allocation4], 0
    %12 = vsyncpa [#allocation9], 0
    // Predicated region
    $region2: #{tpu_custom_call.1} parent=1 // pred_check
      _
    $region3: #{tpu_custom_call.1} parent=1 // pred_check_branch
      %14 = sbr.rel (0) target = $region5
    $region4: #{tpu_custom_call.1} parent=1 // pred_region
      %16 = vsyncadd [#allocation3], 0
      %s18 = sshll.u32 %s0, 4
      %s19 = int_to_ptr.hbm [resolvable:$true] %s18
      %s20 = sshll.u32 [#allocation2], 4
      %s21 = int_to_ptr.vmem [resolvable:$true] %s20
      %23 = dma.hbm_to_vmem [thread:$0]  %s19, 64, %s21, [#allocation3]
    $region5: #{tpu_custom_call.1} parent=1 // pred_fallthru
      _
    // Predicated region
    $region6: #{tpu_custom_call.1} parent=1 // pred_check
      _
    $region7: #{tpu_custom_call.1} parent=1 // pred_check_branch
      %25 = sbr.rel (0) target = $region9
    $region8: #{tpu_custom_call.1} parent=1 // pred_region
      %27 = vsyncadd [#allocation6], 0
      %s29 = sshll.u32 %s1, 4
      %s30 = int_to_ptr.hbm [resolvable:$true] %s29
      %s31 = sshll.u32 [#allocation5], 4
      %s32 = int_to_ptr.vmem [resolvable:$true] %s31
      %34 = dma.hbm_to_vmem [thread:$0]  %s30, 32, %s32, [#allocation6]
    $region9: #{tpu_custom_call.1} parent=1 // pred_fallthru
      _
    // Predicated region
    $region10: #{tpu_custom_call.1} parent=1 // pred_check
      _
    $region11: #{tpu_custom_call.1} parent=1 // pred_check_branch
      %36 = sbr.rel (0) target = $region13
    $region12: #{tpu_custom_call.1} parent=1 // pred_region
      %38 = dma.done [#allocation3], 64
    $region13: #{tpu_custom_call.1} parent=1 // pred_fallthru
      _
    // Predicated region
    $region14: #{tpu_custom_call.1} parent=1 // pred_check
      _
    $region15: #{tpu_custom_call.1} parent=1 // pred_check_branch
      %40 = sbr.rel (0) target = $region17
    $region16: #{tpu_custom_call.1} parent=1 // pred_region
      %42 = dma.done [#allocation6], 32
    $region17: #{tpu_custom_call.1} parent=1 // pred_fallthru
      _
    %v43 = vld [vmem:[#allocation2] sm:$0xf]
    %v44 = vld [vmem:[#allocation5] sm:$0x1]
    %v45 = vld [vmem:[#allocation5 + $0x1] sm:$0x1]
    %v46 = vperm.slane %v44, 0
    %v47 = vsub.f32 %v43, %v46
    %v48 = vperm.slane %v45, 0
    %v49 = vmul.f32 %v47, %v48
    %50 = vst [vmem:[#allocation7] sm:$0xf] %v49
    %vm51 = vcmask 1043456
    %v52 = vsel %vm51, %v43, 0.0
    %v53 = vrot.slane %v52, 4
    %v54 = vadd.f32 %v52, %v53
    %v55 = vrot.slane %v54, 2
    %v56 = vadd.f32 %v54, %v55
    %v57 = vrot.slane %v56, 1
    %v58 = vadd.f32 %v56, %v57
    %59 = vst [vmem:[#allocation8] sm:$0x1] %v58
    // Predicated region
    $region18: #{tpu_custom_call.1} parent=1 // pred_check
      _
    $region19: #{tpu_custom_call.1} parent=1 // pred_check_branch
      %61 = sbr.rel (0) target = $region21
    $region20: #{tpu_custom_call.1} parent=1 // pred_region
      %63 = vsyncadd [#allocation4], 0
      %s65 = sshll.u32 [#allocation7], 4
      %s66 = int_to_ptr.vmem [resolvable:$true] %s65
      %s67 = sshll.u32 %s2, 4
      %s68 = int_to_ptr.hbm [resolvable:$true] %s67
      %70 = dma.vmem_to_hbm [thread:$0]  %s66, 64, %s68, [#allocation4]
    $region21: #{tpu_custom_call.1} parent=1 // pred_fallthru
      _
    // Predicated region
    $region22: #{tpu_custom_call.1} parent=1 // pred_check
      _
    $region23: #{tpu_custom_call.1} parent=1 // pred_check_branch
      %72 = sbr.rel (0) target = $region25
    $region24: #{tpu_custom_call.1} parent=1 // pred_region
      %74 = vsyncadd [#allocation9], 0
      %s76 = sshll.u32 [#allocation8], 4
      %s77 = int_to_ptr.vmem [resolvable:$true] %s76
      %s78 = sshll.u32 %s3, 4
      %s79 = int_to_ptr.hbm [resolvable:$true] %s78
      %81 = dma.vmem_to_hbm [thread:$0]  %s77, 16, %s79, [#allocation9]
    $region25: #{tpu_custom_call.1} parent=1 // pred_fallthru
      _
    // Predicated region
    $region26: #{tpu_custom_call.1} parent=1 // pred_check
      _
    $region27: #{tpu_custom_call.1} parent=1 // pred_check_branch
      %83 = sbr.rel (0) target = $region29
    $region28: #{tpu_custom_call.1} parent=1 // pred_region
      %85 = dma.done [#allocation4], 64
    $region29: #{tpu_custom_call.1} parent=1 // pred_fallthru
      _
    // Predicated region
    $region30: #{tpu_custom_call.1} parent=1 // pred_check
      _
    $region31: #{tpu_custom_call.1} parent=1 // pred_check_branch
      %87 = sbr.rel (0) target = $region33
    $region32: #{tpu_custom_call.1} parent=1 // pred_region
      %89 = dma.done [#allocation9], 16
    $region33: #{tpu_custom_call.1} parent=1 // pred_fallthru
      _
    %90 = vsyncpa [#allocation3], 1
    %91 = vsyncpa [#allocation6], 1
    %92 = vsyncpa [#allocation4], 1
    %93 = vsyncpa [#allocation9], 1

</llo_original>
